<compile_context>
chip_gen: v6e
topology: v6e:2x2x1
jax: 0.10.0
libtpu: 0.0.40
codegen_flags: <defaults>
</compile_context>

<pallas_src>
import math
import functools
import jax
import jax.numpy as jnp
from jax.experimental import pallas as pl
from jax.experimental.pallas import tpu as pltpu

BN_EPS = 1e-5


def _round_up(x, m):
    return (x + m - 1) // m * m


def mlp_kernel(x_ref, w1_ref, b1_ref, w2_ref, b2_ref, o_ref):
    # TODO(synk): Dropout(p=0.05) layers are identity (eval mode); training-mode RNG
    # masks are not reproduced.
    x = x_ref[...].astype(jnp.bfloat16)                       # in-kernel cast
    # Hidden layer: (Linear + folded BatchNorm) -> LeakyReLU(0.1)
    h = jnp.dot(x, w1_ref[...], preferred_element_type=jnp.float32)
    h = h + b1_ref[...]                                        # (BM, H) + (1, H), f32
    h = jnp.maximum(h, 0.1 * h)                                # LeakyReLU(negative_slope=0.1)
    # Output layer: Linear (unpadded d_out columns)
    o = jnp.dot(h.astype(jnp.bfloat16), w2_ref[...],
                preferred_element_type=jnp.float32)
    o_ref[...] = o + b2_ref[...]


def prepare_params(params, eps=BN_EPS):
    """One-time host-side fold: BatchNorm into (w1, b1); bf16 MXU weights."""
    w1, b1, gamma, beta, rmean, rvar, w2, b2 = params
    scale = gamma * jax.lax.rsqrt(rvar + eps)                    # (1, H)
    w1f = (w1 * scale).astype(jnp.bfloat16)                      # (D_in, H)   bf16
    b1f = ((b1 - rmean) * scale + beta).astype(jnp.float32)      # (1, H)      f32
    w2b = w2.astype(jnp.bfloat16)                                # (H, D_out)  bf16
    b2f = b2.astype(jnp.float32)                                 # (1, D_out)  f32
    return w1f, b1f, w2b, b2f


def _vmem_estimate(block_rows, d_in, hidden, d_out):
    """Rough per-step VMEM footprint (lane-padded), for the scoped-VMEM limit."""
    lane, f32, bf16 = 128, 4, 2
    x_tile = block_rows * _round_up(d_in, lane) * f32
    o_tile = block_rows * _round_up(d_out, lane) * f32
    weights = (_round_up(d_in, 16) * _round_up(hidden, lane) * bf16
               + 8 * _round_up(hidden, lane) * f32
               + _round_up(hidden, 16) * _round_up(d_out, lane) * bf16
               + 8 * _round_up(d_out, lane) * f32)
    h_tmp = block_rows * _round_up(hidden, lane) * (f32 + bf16)
    return 2 * (x_tile + o_tile) + 2 * weights + h_tmp


@functools.partial(jax.jit, static_argnames=("target_block_rows",))
def mlp_net_forward(x, w1f, b1f, w2b, b2f, *, target_block_rows=1024):
    B, d_in = x.shape
    H = w1f.shape[1]
    d_out = w2b.shape[1]

    # Row-tile selection: big tiles to amortize per-step grid overhead, but never pad a
    # small batch past sublane granularity; for large B keep >= 2 steps so v7x's two
    # TensorCores both get work.
    block_rows = min(_round_up(target_block_rows, 8), _round_up(B, 8))
    if B >= 512:
        block_rows = min(block_rows, _round_up(pl.cdiv(B, 2), 8))
    n_blocks = pl.cdiv(B, block_rows)
    Bp = n_blocks * block_rows
    if Bp != B:
        x = jnp.pad(x, ((0, Bp - B), (0, 0)))

    flops = 2 * Bp * (d_in * H + H * d_out)
    bytes_accessed = (Bp * d_in * 4                      # x (f32, cast in-kernel)
                      + w1f.size * 2 + w2b.size * 2
                      + b1f.size * 4 + b2f.size * 4
                      + Bp * d_out * 4)                  # output (f32, unpadded)

    vmem_limit = int(min(max(2 * _vmem_estimate(block_rows, d_in, H, d_out),
                             16 << 20), 48 << 20))

    out = pl.pallas_call(
        mlp_kernel,
        out_shape=jax.ShapeDtypeStruct((Bp, d_out), jnp.float32),
        grid=(n_blocks,),
        in_specs=[
            pl.BlockSpec((block_rows, d_in), lambda i: (i, 0)),   # x tile (pipelined)
            pl.BlockSpec((d_in, H), lambda i: (0, 0)),            # w1 (VMEM-resident)
            pl.BlockSpec((1, H), lambda i: (0, 0)),               # b1 (BN-folded)
            pl.BlockSpec((H, d_out), lambda i: (0, 0)),           # w2
            pl.BlockSpec((1, d_out), lambda i: (0, 0)),           # b2
        ],
        out_specs=pl.BlockSpec((block_rows, d_out), lambda i: (i, 0)),
        compiler_params=pltpu.CompilerParams(
            dimension_semantics=("parallel",),
            vmem_limit_bytes=vmem_limit),
        cost_estimate=pl.CostEstimate(
            flops=flops, transcendentals=0, bytes_accessed=bytes_accessed),
    )(x, w1f, b1f, w2b, b2f)

    return out[:B]


def init_params(key, input_dim, hidden, output_dim):
    """Deterministic init mirroring MlpNet.__init__ / _weight_init (eval mode)."""
    k1, k2, k3, k4 = jax.random.split(key, 4)

    # kaiming_normal_(a=0.1, mode='fan_in', nonlinearity='leaky_relu'):
    # std = gain / sqrt(fan_in), gain = sqrt(2 / (1 + a^2))
    gain = math.sqrt(2.0 / (1.0 + 0.1 ** 2))

    std1 = gain / math.sqrt(input_dim)
    w1 = jax.random.normal(k1, (input_dim, hidden), jnp.float32) * std1  # (in, out)
    bound1 = 1.0 / math.sqrt(input_dim)
    b1 = jax.random.uniform(k2, (1, hidden), jnp.float32, -bound1, bound1)

    # BatchNorm1d(hidden): gamma=1, beta=0, running_mean=0, running_var=1
    gamma = jnp.ones((1, hidden), jnp.float32)
    beta = jnp.zeros((1, hidden), jnp.float32)
    rmean = jnp.zeros((1, hidden), jnp.float32)
    rvar = jnp.ones((1, hidden), jnp.float32)

    std2 = gain / math.sqrt(hidden)
    w2 = jax.random.normal(k3, (hidden, output_dim), jnp.float32) * std2
    bound2 = 1.0 / math.sqrt(hidden)
    b2 = jax.random.uniform(k4, (1, output_dim), jnp.float32, -bound2, bound2)

    return (w1, b1, gamma, beta, rmean, rvar, w2, b2)


def _reference_f32(x, params):
    w1, b1, gamma, beta, rmean, rvar, w2, b2 = params
    h = x @ w1 + b1
    h = (h - rmean) * jax.lax.rsqrt(rvar + BN_EPS) * gamma + beta
    h = jnp.where(h >= 0, h, 0.1 * h)
    return h @ w2 + b2


def _reference_bf16(x, params):
    """Kernel-precision reference (bf16 MXU operands, f32 accumulation)."""
    w1, b1, gamma, beta, rmean, rvar, w2, b2 = params
    scale = gamma * jax.lax.rsqrt(rvar + BN_EPS)
    w1f = (w1 * scale).astype(jnp.bfloat16)
    b1f = (b1 - rmean) * scale + beta
    h = jnp.dot(x.astype(jnp.bfloat16), w1f, preferred_element_type=jnp.float32) + b1f
    h = jnp.maximum(h, 0.1 * h)
    return jnp.dot(h.astype(jnp.bfloat16), w2.astype(jnp.bfloat16),
                   preferred_element_type=jnp.float32) + b2


if __name__ == "__main__":
    D_IN, HIDDEN, D_OUT = 32, 256, 8   # layers=(256,) default

    key = jax.random.PRNGKey(0)
    kx, kp, kx2 = jax.random.split(key, 3)
    params = init_params(kp, D_IN, HIDDEN, D_OUT)
    fused = prepare_params(params)               # host-side BN fold + bf16 weights

    # Small-batch path (single grid step, batch padded only to sublane granularity).
    B = 8
    x = jax.random.normal(kx, (B, D_IN), jnp.float32)
    out = mlp_net_forward(x, *fused)
    jax.block_until_ready(out)
    assert out.shape == (B, D_OUT)
    assert jnp.allclose(out, _reference_f32(x, params), atol=5e-2, rtol=5e-2)
    assert jnp.allclose(out, _reference_bf16(x, params), atol=2e-3, rtol=2e-3)

    # Multi-block path (exercises batch padding + pipelined grid).
    B2 = 2050
    x2 = jax.random.normal(kx2, (B2, D_IN), jnp.float32)
    out2 = mlp_net_forward(x2, *fused)
    jax.block_until_ready(out2)
    assert out2.shape == (B2, D_OUT)
    assert jnp.allclose(out2, _reference_f32(x2, params), atol=5e-2, rtol=5e-2)
    assert jnp.allclose(out2, _reference_bf16(x2, params), atol=2e-3, rtol=2e-3)

    print("KERNEL_OK")
</pallas_src>

<mosaic_0001>
module attributes {stable_mosaic.version = 11 : i64} {
  func.func @mlp_kernel(%arg0: i32, %arg1: memref<8x32xf32, #tpu.memory_space<vmem>>, %arg2: memref<32x256xbf16, #tpu.memory_space<vmem>>, %arg3: memref<1x256xf32, #tpu.memory_space<vmem>>, %arg4: memref<256x8xbf16, #tpu.memory_space<vmem>>, %arg5: memref<1x8xf32, #tpu.memory_space<vmem>>, %arg6: memref<8x8xf32, #tpu.memory_space<vmem>>) attributes {dimension_semantics = [#tpu.dimension_semantics<parallel>], iteration_bounds = array<i64: 1>, scalar_prefetch = 0 : i64, scratch_operands = 0 : i64, tpu.core_type = #tpu.core_type<tc>, window_params = [{transform_indices = @transform_0, window_bounds = array<i64: 8, 32>}, {pipeline_mode = #tpu.pipeline_mode<synchronous>, transform_indices = @transform_1, window_bounds = array<i64: 32, 256>}, {pipeline_mode = #tpu.pipeline_mode<synchronous>, transform_indices = @transform_2, window_bounds = array<i64: 1, 256>}, {pipeline_mode = #tpu.pipeline_mode<synchronous>, transform_indices = @transform_3, window_bounds = array<i64: 256, 8>}, {pipeline_mode = #tpu.pipeline_mode<synchronous>, transform_indices = @transform_4, window_bounds = array<i64: 1, 8>}, {transform_indices = @transform_5, window_bounds = array<i64: 8, 8>}]} {
    %c0 = arith.constant 0 : index
    %c0_0 = arith.constant 0 : index
    %0 = vector.load %arg1[%c0, %c0_0] : memref<8x32xf32, #tpu.memory_space<vmem>>, vector<8x32xf32>
    %1 = arith.truncf %0 : vector<8x32xf32> to vector<8x32xbf16>
    %c0_1 = arith.constant 0 : index
    %c0_2 = arith.constant 0 : index
    %2 = vector.load %arg2[%c0_1, %c0_2] : memref<32x256xbf16, #tpu.memory_space<vmem>>, vector<32x256xbf16>
    %cst = arith.constant dense<0.000000e+00> : vector<8x256xf32>
    %3 = tpu.matmul %1, %2, %cst {dimension_numbers = #tpu.dot_dimension_numbers<[1], [0], [0], [1], [0, 0, 1, 1], [], []>} : vector<8x32xbf16>, vector<32x256xbf16>, vector<8x256xf32> -> vector<8x256xf32>
    %c0_3 = arith.constant 0 : index
    %c0_4 = arith.constant 0 : index
    %4 = vector.load %arg3[%c0_3, %c0_4] : memref<1x256xf32, #tpu.memory_space<vmem>>, vector<1x256xf32>
    %5 = vector.broadcast %4 : vector<1x256xf32> to vector<8x256xf32>
    %6 = arith.addf %3, %5 : vector<8x256xf32>
    %cst_5 = arith.constant 1.000000e-01 : f32
    %7 = vector.broadcast %cst_5 : f32 to vector<8x256xf32>
    %8 = arith.mulf %7, %6 : vector<8x256xf32>
    %9 = arith.maximumf %6, %8 : vector<8x256xf32>
    %10 = arith.truncf %9 : vector<8x256xf32> to vector<8x256xbf16>
    %c0_6 = arith.constant 0 : index
    %c0_7 = arith.constant 0 : index
    %11 = vector.load %arg4[%c0_6, %c0_7] : memref<256x8xbf16, #tpu.memory_space<vmem>>, vector<256x8xbf16>
    %cst_8 = arith.constant dense<0.000000e+00> : vector<8x8xf32>
    %12 = tpu.matmul %10, %11, %cst_8 {dimension_numbers = #tpu.dot_dimension_numbers<[1], [0], [0], [1], [0, 0, 1, 1], [], []>} : vector<8x256xbf16>, vector<256x8xbf16>, vector<8x8xf32> -> vector<8x8xf32>
    %c0_9 = arith.constant 0 : index
    %c0_10 = arith.constant 0 : index
    %13 = vector.load %arg5[%c0_9, %c0_10] : memref<1x8xf32, #tpu.memory_space<vmem>>, vector<1x8xf32>
    %14 = vector.broadcast %13 : vector<1x8xf32> to vector<8x8xf32>
    %15 = arith.addf %12, %14 : vector<8x8xf32>
    %c0_11 = arith.constant 0 : index
    %c0_12 = arith.constant 0 : index
    %16 = vector.load %arg6[%c0_11, %c0_12] : memref<8x8xf32, #tpu.memory_space<vmem>>, vector<8x8xf32>
    tpu.vector_store %arg6[%c0_11, %c0_12], %15 {strides = array<i32>} : memref<8x8xf32, #tpu.memory_space<vmem>>, vector<8x8xf32>,
    return
  }
  func.func @transform_0(%arg0: i32) -> (i32, i32) {
    %c0_i32 = arith.constant 0 : i32
    %c0_i32_0 = arith.constant 0 : i32
    return %arg0, %c0_i32 : i32, i32
  }
  func.func @transform_1(%arg0: i32) -> (i32, i32) {
    %c0_i32 = arith.constant 0 : i32
    %c0_i32_0 = arith.constant 0 : i32
    %c0_i32_1 = arith.constant 0 : i32
    return %c0_i32, %c0_i32_0 : i32, i32
  }
  func.func @transform_2(%arg0: i32) -> (i32, i32) {
    %c0_i32 = arith.constant 0 : i32
    %c0_i32_0 = arith.constant 0 : i32
    %c0_i32_1 = arith.constant 0 : i32
    return %c0_i32, %c0_i32_0 : i32, i32
  }
  func.func @transform_3(%arg0: i32) -> (i32, i32) {
    %c0_i32 = arith.constant 0 : i32
    %c0_i32_0 = arith.constant 0 : i32
    %c0_i32_1 = arith.constant 0 : i32
    return %c0_i32, %c0_i32_0 : i32, i32
  }
  func.func @transform_4(%arg0: i32) -> (i32, i32) {
    %c0_i32 = arith.constant 0 : i32
    %c0_i32_0 = arith.constant 0 : i32
    %c0_i32_1 = arith.constant 0 : i32
    return %c0_i32, %c0_i32_0 : i32, i32
  }
  func.func @transform_5(%arg0: i32) -> (i32, i32) {
    %c0_i32 = arith.constant 0 : i32
    %c0_i32_0 = arith.constant 0 : i32
    return %arg0, %c0_i32 : i32, i32
  }
}

</mosaic_0001>

<llo_original>
// kernel: mlp_net_forward.1
$region0: #{mlp_net_forward.1}
  #allocation0 [shape = 'u32[]', space=smem, size = 0x4, offset = 0x4, fixed_abs, tag = 'smem constant byte address 0x4 - core index']
  #allocation1 [shape = 'u32[144,128]{1,0:T(1,128)}', space=vmem, size = 0x12000, scoped, tag = 'internal scratch']
  %s0 = inlined_call_operand.vmem [shape: f32[8,32], index: 0, kind: input, shape index: {}]
  %s1 = inlined_call_operand.vmem [shape: bf16[32,256], index: 1, kind: input, shape index: {}]
  %s2 = inlined_call_operand.vmem [shape: f32[1,256], index: 2, kind: input, shape index: {}]
  %s3 = inlined_call_operand.vmem [shape: bf16[256,8], index: 3, kind: input, shape index: {}]
  %s4 = inlined_call_operand.vmem [shape: f32[1,8], index: 4, kind: input, shape index: {}]
  %s5 = inlined_call_operand.hbm [shape: f32[8,8], index: 5, kind: output, shape index: {}]
  %s6 = sld [smem:[#allocation0]]
  $region30: #{mlp_net_forward.1} parent=0
    _
  %s8 = ssub.s32 1, %s6
  %s9 = scalar_select 0, %s8, %s6
  $region1: #{mlp_net_forward.1} parent=0
    #allocation2 [shape = 'u8[4096]{0}', space=vmem, size = 0x1000, scoped, tag = 'output window, operand 0, single buffered']
    #allocation3 [shape = 's32[1]{0}', space=sflag, size = 0x4, scoped, tag = 'scoped memory for mlp_net_forward.1']
    %10 = vsyncpa [#allocation3], 0
    // Predicated region
    $region2: #{mlp_net_forward.1} parent=1 // pred_check
      _
    $region3: #{mlp_net_forward.1} parent=1 // pred_check_branch
      %12 = sbr.rel (0) target = $region5
    $region4: #{mlp_net_forward.1} parent=1 // pred_region
      _
    $region5: #{mlp_net_forward.1} parent=1 // pred_fallthru
      _
    // Predicated region
    $region6: #{mlp_net_forward.1} parent=1 // pred_check
      _
    $region7: #{mlp_net_forward.1} parent=1 // pred_check_branch
      %14 = sbr.rel (0) target = $region9
    $region8: #{mlp_net_forward.1} parent=1 // pred_region
      _
    $region9: #{mlp_net_forward.1} parent=1 // pred_fallthru
      _
    // Predicated region
    $region10: #{mlp_net_forward.1} parent=1 // pred_check
      _
    $region11: #{mlp_net_forward.1} parent=1 // pred_check_branch
      %16 = sbr.rel (0) target = $region13
    $region12: #{mlp_net_forward.1} parent=1 // pred_region
      _
    $region13: #{mlp_net_forward.1} parent=1 // pred_fallthru
      _
    // Predicated region
    $region14: #{mlp_net_forward.1} parent=1 // pred_check
      _
    $region15: #{mlp_net_forward.1} parent=1 // pred_check_branch
      %18 = sbr.rel (0) target = $region17
    $region16: #{mlp_net_forward.1} parent=1 // pred_region
      _
    $region17: #{mlp_net_forward.1} parent=1 // pred_fallthru
      _
    // Predicated region
    $region18: #{mlp_net_forward.1} parent=1 // pred_check
      _
    $region19: #{mlp_net_forward.1} parent=1 // pred_check_branch
      %20 = sbr.rel (0) target = $region21
    $region20: #{mlp_net_forward.1} parent=1 // pred_region
      _
    $region21: #{mlp_net_forward.1} parent=1 // pred_fallthru
      _
    %v22 = vld [vmem:[%s0] sm:$0xff]
    %v23 = vpack.c.bf16 %v22, %v22
    %v24 = vld [vmem:[%s1] sm:$0xff]
    %v25 = vld [vmem:[%s1 + $0x8] sm:$0xff]
    %v26 = vld [vmem:[%s1 + $0x10] sm:$0xff]
    %v27 = vld [vmem:[%s1 + $0x18] sm:$0xff]
    %v28 = vld [vmem:[%s2] sm:$0x3]
    %v30 = vlaneseq
    %v31 = vshrl.u32 %v30, 7
    %v32 = vsub.s32 0, %v31
    %v33 = vrot.slane %v28, %v32
    %v34 = vlaneseq
    %v35 = vshrl.u32 %v34, 7
    %v36 = vsub.s32 1, %v35
    %v37 = vrot.slane %v28, %v36
    %v44 = vunpack.c.l.b16 %v24
    %v45 = vunpack.c.h.b16 %v24
    %v46 = vunpack.c.l.b16 %v25
    %v47 = vunpack.c.h.b16 %v25
    %v48 = vunpack.c.l.b16 %v26
    %v49 = vunpack.c.h.b16 %v26
    %v50 = vunpack.c.l.b16 %v27
    %v51 = vunpack.c.h.b16 %v27
    %v52 = vpack.c.b16 %v46, %v44
    %v53 = vpack.c.b16 %v47, %v45
    %v54 = vpack.c.b16 %v50, %v48
    %v55 = vpack.c.b16 %v51, %v49
    %vm60 = vcmask 261120
    %v62 = vsel %vm60, %v23, 0
    %64 = vmatprep.subr.bf16.mxu0 0
    %65 = vmatpush1.bf16.msra.mxu0 0
    %66 = vmatprep.subr.bf16.mxu0 0
    %67 = vmatpush1.bf16.msra.mxu0 0
    %68 = vmatprep.subr.bf16.mxu0 0
    %69 = vmatpush1.bf16.msra.mxu0 0
    %70 = vmatprep.subr.bf16.mxu0 0
    %71 = vmatpush1.bf16.msra.mxu0 0
    %72 = vmatprep.subr.bf16.mxu0 0
    %73 = vmatpush1.bf16.msra.mxu0 0
    %74 = vmatprep.subr.bf16.mxu0 0
    %75 = vmatpush1.bf16.msra.mxu0 0
    %76 = vmatprep.subr.bf16.mxu0 %v55
    %77 = vmatpush1.bf16.msra.mxu0 %v54
    %78 = vmatprep.subr.bf16.mxu0 %v53
    %79 = vmatpush1.bf16.msra.mxu0 %v52
    %80 = vmatprep.subr.bf16.mxu0 0
    %81 = vmatpush2.bf16.msra.mxu0 0
    %82 = vmatprep.subr.bf16.mxu0 0
    %83 = vmatpush2.bf16.msra.mxu0 0
    %84 = vmatprep.subr.bf16.mxu0 0
    %85 = vmatpush2.bf16.msra.mxu0 0
    %86 = vmatprep.subr.bf16.mxu0 0
    %87 = vmatpush2.bf16.msra.mxu0 0
    %88 = vmatprep.subr.bf16.mxu0 0
    %89 = vmatpush2.bf16.msra.mxu0 0
    %90 = vmatprep.subr.bf16.mxu0 0
    %91 = vmatpush2.bf16.msra.mxu0 0
    %92 = vmatprep.subr.bf16.mxu0 0
    %93 = vmatpush2.bf16.msra.mxu0 0
    %94 = vmatprep.subr.bf16.mxu0 0
    %95 = vmatpush2.bf16.msra.mxu0 0
    %96 = vmatprep.mubr.bf16.mxu0 0
    %97 = vmatmul.mubr.bf16.gmra.mxu0 %v62
    %v98 = vpop.f32.mrf.mxu0
    %v99 = vadd.f32 %v33, %v98
    %v100 = vpop.f32.mrf.mxu0
    %v101 = vadd.f32 %v37, %v100
    %v102 = vpop.f32.mrf.mxu0
    %v103 = vpop.f32.mrf.mxu0
    %104 = vdwg.mxu0
    %v105 = vmul.f32 %v99, 0.1
    %v106 = vmul.f32 %v101, 0.1
    %v107 = vmax.f32 %v99, %v105
    %v108 = vmax.f32 %v101, %v106
    %v109 = vpack.c.bf16 %v107, %v107
    %v110 = vpack.c.bf16 %v108, %v108
    %v111 = vld [vmem:[%s3] sm:$0xf]
    %v112 = vld [vmem:[%s3 + $0x4] sm:$0xf]
    %v113 = vld [vmem:[%s3 + $0x8] sm:$0xf]
    %v114 = vld [vmem:[%s3 + $0xc] sm:$0xf]
    %v115 = vld [vmem:[%s3 + $0x10] sm:$0xf]
    %v116 = vld [vmem:[%s3 + $0x14] sm:$0xf]
    %v117 = vld [vmem:[%s3 + $0x18] sm:$0xf]
    %v118 = vld [vmem:[%s3 + $0x1c] sm:$0xf]
    %v119 = vld [vmem:[%s3 + $0x20] sm:$0xf]
    %v120 = vld [vmem:[%s3 + $0x24] sm:$0xf]
    %v121 = vld [vmem:[%s3 + $0x28] sm:$0xf]
    %v122 = vld [vmem:[%s3 + $0x2c] sm:$0xf]
    %v123 = vld [vmem:[%s3 + $0x30] sm:$0xf]
    %v124 = vld [vmem:[%s3 + $0x34] sm:$0xf]
    %v125 = vld [vmem:[%s3 + $0x38] sm:$0xf]
    %v126 = vld [vmem:[%s3 + $0x3c] sm:$0xf]
    %v127 = vld [vmem:[%s3 + $0x40] sm:$0xf]
    %v128 = vld [vmem:[%s3 + $0x44] sm:$0xf]
    %v129 = vld [vmem:[%s3 + $0x48] sm:$0xf]
    %v130 = vld [vmem:[%s3 + $0x4c] sm:$0xf]
    %v131 = vld [vmem:[%s3 + $0x50] sm:$0xf]
    %v132 = vld [vmem:[%s3 + $0x54] sm:$0xf]
    %v133 = vld [vmem:[%s3 + $0x58] sm:$0xf]
    %v134 = vld [vmem:[%s3 + $0x5c] sm:$0xf]
    %v135 = vld [vmem:[%s3 + $0x60] sm:$0xf]
    %v136 = vld [vmem:[%s3 + $0x64] sm:$0xf]
    %v137 = vld [vmem:[%s3 + $0x68] sm:$0xf]
    %v138 = vld [vmem:[%s3 + $0x6c] sm:$0xf]
    %v139 = vld [vmem:[%s3 + $0x70] sm:$0xf]
    %v140 = vld [vmem:[%s3 + $0x74] sm:$0xf]
    %v141 = vld [vmem:[%s3 + $0x78] sm:$0xf]
    %v142 = vld [vmem:[%s3 + $0x7c] sm:$0xf]
    %v143 = vld [vmem:[%s4] sm:$0x1]
    %v145 = vlaneseq
    %v146 = vshrl.u32 %v145, 7
    %v147 = vsub.s32 0, %v146
    %v148 = vrot.slane %v143, %v147
    %v182 = vunpack.c.l.b16 %v111
    %v183 = vunpack.c.l.b16 %v112
    %v184 = vunpack.c.l.b16 %v113
    %v185 = vunpack.c.l.b16 %v114
    %v186 = vunpack.c.l.b16 %v115
    %v187 = vunpack.c.l.b16 %v116
    %v188 = vunpack.c.l.b16 %v117
    %v189 = vunpack.c.l.b16 %v118
    %v190 = vunpack.c.l.b16 %v119
    %v191 = vunpack.c.l.b16 %v120
    %v192 = vunpack.c.l.b16 %v121
    %v193 = vunpack.c.l.b16 %v122
    %v194 = vunpack.c.l.b16 %v123
    %v195 = vunpack.c.l.b16 %v124
    %v196 = vunpack.c.l.b16 %v125
    %v197 = vunpack.c.l.b16 %v126
    %v198 = vunpack.c.l.b16 %v127
    %v199 = vunpack.c.l.b16 %v128
    %v200 = vunpack.c.l.b16 %v129
    %v201 = vunpack.c.l.b16 %v130
    %v202 = vunpack.c.l.b16 %v131
    %v203 = vunpack.c.l.b16 %v132
    %v204 = vunpack.c.l.b16 %v133
    %v205 = vunpack.c.l.b16 %v134
    %v206 = vunpack.c.l.b16 %v135
    %v207 = vunpack.c.l.b16 %v136
    %v208 = vunpack.c.l.b16 %v137
    %v209 = vunpack.c.l.b16 %v138
    %v210 = vunpack.c.l.b16 %v139
    %v211 = vunpack.c.l.b16 %v140
    %v212 = vunpack.c.l.b16 %v141
    %v213 = vunpack.c.l.b16 %v142
    %v214 = vpack.c.b16 %v183, %v182
    %v215 = vpack.c.b16 %v185, %v184
    %v216 = vpack.c.b16 %v187, %v186
    %v217 = vpack.c.b16 %v189, %v188
    %v218 = vpack.c.b16 %v191, %v190
    %v219 = vpack.c.b16 %v193, %v192
    %v220 = vpack.c.b16 %v195, %v194
    %v221 = vpack.c.b16 %v197, %v196
    %v222 = vpack.c.b16 %v199, %v198
    %v223 = vpack.c.b16 %v201, %v200
    %v224 = vpack.c.b16 %v203, %v202
    %v225 = vpack.c.b16 %v205, %v204
    %v226 = vpack.c.b16 %v207, %v206
    %v227 = vpack.c.b16 %v209, %v208
    %v228 = vpack.c.b16 %v211, %v210
    %v229 = vpack.c.b16 %v213, %v212
    %246 = vmatprep.subr.bf16.mxu0 0
    %247 = vmatpush1.bf16.msra.mxu0 %v221
    %248 = vmatprep.subr.bf16.mxu0 0
    %249 = vmatpush1.bf16.msra.mxu0 %v220
    %250 = vmatprep.subr.bf16.mxu0 0
    %251 = vmatpush1.bf16.msra.mxu0 %v219
    %252 = vmatprep.subr.bf16.mxu0 0
    %253 = vmatpush1.bf16.msra.mxu0 %v218
    %254 = vmatprep.subr.bf16.mxu0 0
    %255 = vmatpush1.bf16.msra.mxu0 %v217
    %256 = vmatprep.subr.bf16.mxu0 0
    %257 = vmatpush1.bf16.msra.mxu0 %v216
    %258 = vmatprep.subr.bf16.mxu0 0
    %259 = vmatpush1.bf16.msra.mxu0 %v215
    %260 = vmatprep.subr.bf16.mxu0 0
    %261 = vmatpush1.bf16.msra.mxu0 %v214
    %262 = vmatprep.subr.bf16.mxu0 0
    %263 = vmatpush2.bf16.msra.mxu0 %v229
    %264 = vmatprep.subr.bf16.mxu0 0
    %265 = vmatpush2.bf16.msra.mxu0 %v228
    %266 = vmatprep.subr.bf16.mxu0 0
    %267 = vmatpush2.bf16.msra.mxu0 %v227
    %268 = vmatprep.subr.bf16.mxu0 0
    %269 = vmatpush2.bf16.msra.mxu0 %v226
    %270 = vmatprep.subr.bf16.mxu0 0
    %271 = vmatpush2.bf16.msra.mxu0 %v225
    %272 = vmatprep.subr.bf16.mxu0 0
    %273 = vmatpush2.bf16.msra.mxu0 %v224
    %274 = vmatprep.subr.bf16.mxu0 0
    %275 = vmatpush2.bf16.msra.mxu0 %v223
    %276 = vmatprep.subr.bf16.mxu0 0
    %277 = vmatpush2.bf16.msra.mxu0 %v222
    %278 = vmatprep.mubr.bf16.mxu0 %v110
    %279 = vmatmul.mubr.bf16.gmra.mxu0 %v109
    %v280 = vpop.f32.mrf.mxu0
    %v281 = vadd.f32 %v148, %v280
    %v282 = vpop.f32.mrf.mxu0
    %v283 = vpop.f32.mrf.mxu0
    %v284 = vpop.f32.mrf.mxu0
    %285 = vdwg.mxu0
    %vm286 = vcmask 64512
    %287 = vst.msk [vmem:[#allocation2] sm:$0xff] %vm286, %v281
    // Predicated region
    $region22: #{mlp_net_forward.1} parent=1 // pred_check
      _
    $region23: #{mlp_net_forward.1} parent=1 // pred_check_branch
      %289 = sbr.rel (0) target = $region25
    $region24: #{mlp_net_forward.1} parent=1 // pred_region
      %s291 = ssub.s32 128, 128
      %292 = vsyncadd [#allocation3], %s291
      %s294 = sshll.u32 [#allocation2], 4
      %s295 = int_to_ptr.vmem [resolvable:$true] %s294
      %297 = dma.vmem_to_hbm [thread:$0]  %s295, 128, %s5, [#allocation3]
    $region25: #{mlp_net_forward.1} parent=1 // pred_fallthru
      _
    // Predicated region
    $region26: #{mlp_net_forward.1} parent=1 // pred_check
      _
    $region27: #{mlp_net_forward.1} parent=1 // pred_check_branch
      %299 = sbr.rel (0) target = $region29
    $region28: #{mlp_net_forward.1} parent=1 // pred_region
      %300 = dma.done [#allocation3], 128
    $region29: #{mlp_net_forward.1} parent=1 // pred_fallthru
      _
    %301 = vsyncpa [#allocation3], 1

</llo_original>
